<compile_context>
chip_gen: v5e
topology: v5e:2x2
jax: 0.10.0
libtpu: 0.0.40
codegen_flags: <defaults>
</compile_context>

<pallas_src>
import functools

import jax
import jax.numpy as jnp
from jax.experimental import pallas as pl
from jax.experimental.pallas import tpu as pltpu

BN_EPS = 1e-5


def _round_up(x, m):
    return (x + m - 1) // m * m


# ---------------------------------------------------------------------------
# Pass 1: conv tile (MXU) + per-tile channel stats
# ---------------------------------------------------------------------------
def _conv_stats_kernel(p_ref, w_ref, conv_ref, stats_ref):
    # (tile_m, K_pad) @ (K_pad, C_pad) on the MXU, bf16 inputs, f32 accumulator.
    conv = jnp.dot(p_ref[...], w_ref[...], preferred_element_type=jnp.float32)
    conv_ref[...] = conv
    # Per-channel partial sums for this M tile (zero-padded rows contribute 0
    # because the conv bias was dropped).
    s = jnp.sum(conv, axis=0, keepdims=True)          # (1, C_pad)
    sq = jnp.sum(conv * conv, axis=0, keepdims=True)  # (1, C_pad)
    stats_ref[0] = jnp.concatenate([s, sq], axis=0)   # (2, C_pad)


# ---------------------------------------------------------------------------
# Pass 2: streaming BatchNorm (precomputed scale/shift) + ReLU
# ---------------------------------------------------------------------------
def _bn_relu_kernel(conv_ref, scale_ref, shift_ref, o_ref):
    y = conv_ref[...] * scale_ref[...] + shift_ref[...]
    o_ref[...] = jnp.maximum(y, 0.0).astype(o_ref.dtype)


def _im2col_nhwc(x_nchw, kernel, pad, stride):
    """(N, C, H, W) -> (N*Ho*Wo, kh*kw*C) patches with (i, j, c) column order.

    Built from an NHWC view so the patch matrix is produced contiguously with no
    large transpose of the kh*kw-amplified slab.
    """
    N, C, H, W = x_nchw.shape
    Ho = (H + 2 * pad - kernel) // stride + 1
    Wo = (W + 2 * pad - kernel) // stride + 1
    x_nhwc = jnp.transpose(x_nchw, (0, 2, 3, 1))                     # small transpose of x only
    xp = jnp.pad(x_nhwc, ((0, 0), (pad, pad), (pad, pad), (0, 0)))
    cols = []
    for i in range(kernel):
        for j in range(kernel):
            cols.append(
                xp[:, i : i + stride * Ho : stride, j : j + stride * Wo : stride, :]
            )                                                         # (N, Ho, Wo, C)
    patches = jnp.concatenate(cols, axis=-1)                          # (N, Ho, Wo, kh*kw*C)
    return patches.reshape(N * Ho * Wo, kernel * kernel * C), Ho, Wo


@functools.partial(jax.jit, static_argnames=("kernel", "pad", "stride"))
def encode_block(x, conv_w, conv_b, bn_gamma, bn_beta, *, kernel, pad, stride):
    """x: (N, in_ch, H, W) float32 -> (N, out_ch, Ho, Wo) float32."""
    del conv_b  # exactly cancelled by train-mode BatchNorm mean subtraction
    N, in_ch, H, W = x.shape
    out_ch = conv_w.shape[0]

    patches, Ho, Wo = _im2col_nhwc(x, kernel, pad, stride)            # (M, K)
    M, K = patches.shape

    # MXU / lane-friendly padded sizes.
    K_pad = _round_up(K, 128)
    C_pad = _round_up(out_ch, 128)
    tile_m = min(512, _round_up(M, 8))
    M_pad = _round_up(M, tile_m)
    num_tiles = M_pad // tile_m

    # Weight matrix in (kh, kw, in_ch) column order to match the patch layout.
    w_mat = conv_w.transpose(2, 3, 1, 0).reshape(K, out_ch)

    # Zero-pad and cast the MXU operands to bf16 (accumulation stays f32).
    patches_p = jnp.pad(patches, ((0, M_pad - M), (0, K_pad - K))).astype(jnp.bfloat16)
    w_p = jnp.pad(w_mat, ((0, K_pad - K), (0, C_pad - out_ch))).astype(jnp.bfloat16)

    cparams = pltpu.CompilerParams(
        dimension_semantics=("parallel",),
        vmem_limit_bytes=32 << 20,  # safe on v5e/v6e and within v7x's 64 MiB physical
    )

    # ---- pass 1: conv + per-tile stats --------------------------------------
    conv_flat, stats = pl.pallas_call(
        _conv_stats_kernel,
        out_shape=(
            jax.ShapeDtypeStruct((M_pad, C_pad), jnp.float32),
            jax.ShapeDtypeStruct((num_tiles, 2, C_pad), jnp.float32),
        ),
        grid=(num_tiles,),
        in_specs=[
            pl.BlockSpec((tile_m, K_pad), lambda i: (i, 0)),
            pl.BlockSpec((K_pad, C_pad), lambda i: (0, 0)),
        ],
        out_specs=(
            pl.BlockSpec((tile_m, C_pad), lambda i: (i, 0)),
            pl.BlockSpec((1, 2, C_pad), lambda i: (i, 0, 0)),
        ),
        compiler_params=cparams,
    )(patches_p, w_p)

    # ---- finalize BN stats (tiny, done in the wrapper) -----------------------
    tot = jnp.sum(stats, axis=0)                      # (2, C_pad), f32 accumulation
    mean = tot[0] / jnp.float32(M)                    # true M (padded rows contributed 0)
    var = jnp.maximum(tot[1] / jnp.float32(M) - mean * mean, 0.0)  # biased, train-mode
    inv_std = jax.lax.rsqrt(var + BN_EPS)
    gamma_p = jnp.pad(bn_gamma, (0, C_pad - out_ch))
    beta_p = jnp.pad(bn_beta, (0, C_pad - out_ch))
    scale = (gamma_p * inv_std).reshape(1, C_pad).astype(jnp.float32)
    shift = (beta_p - mean * gamma_p * inv_std).reshape(1, C_pad).astype(jnp.float32)

    # ---- pass 2: streaming normalize + ReLU ----------------------------------
    out_flat = pl.pallas_call(
        _bn_relu_kernel,
        out_shape=jax.ShapeDtypeStruct((M_pad, C_pad), jnp.float32),
        grid=(num_tiles,),
        in_specs=[
            pl.BlockSpec((tile_m, C_pad), lambda i: (i, 0)),
            pl.BlockSpec((1, C_pad), lambda i: (0, 0)),
            pl.BlockSpec((1, C_pad), lambda i: (0, 0)),
        ],
        out_specs=pl.BlockSpec((tile_m, C_pad), lambda i: (i, 0)),
        compiler_params=cparams,
    )(conv_flat, scale, shift)

    # Strip padding and return NCHW.
    out = out_flat[:M, :out_ch].reshape(N, Ho, Wo, out_ch)
    return out.transpose(0, 3, 1, 2)


def _reference(x, conv_w, conv_b, bn_gamma, bn_beta, *, kernel, pad, stride):
    """Pure-JAX reference mirroring PyTorch Conv2d + train-mode BatchNorm2d + ReLU."""
    conv = jax.lax.conv_general_dilated(
        x, conv_w,
        window_strides=(stride, stride),
        padding=[(pad, pad), (pad, pad)],
        dimension_numbers=("NCHW", "OIHW", "NCHW"),
    ) + conv_b.reshape(1, -1, 1, 1)
    mean = conv.mean(axis=(0, 2, 3), keepdims=True)
    var = ((conv - mean) ** 2).mean(axis=(0, 2, 3), keepdims=True)
    y = (conv - mean) * jax.lax.rsqrt(var + BN_EPS)
    y = y * bn_gamma.reshape(1, -1, 1, 1) + bn_beta.reshape(1, -1, 1, 1)
    return jnp.maximum(y, 0.0)


if __name__ == "__main__":
    # EncodeBlock(in_ch, out_ch, kernel, pad, stride) at small shapes.
    in_ch, out_ch, kernel, pad, stride = 4, 8, 3, 1, 2
    N, H, W = 2, 16, 16

    key = jax.random.PRNGKey(0)
    k_x, k_w, k_b, k_g, k_be = jax.random.split(key, 5)

    x = jax.random.normal(k_x, (N, in_ch, H, W), dtype=jnp.float32)
    conv_w = 0.1 * jax.random.normal(k_w, (out_ch, in_ch, kernel, kernel), dtype=jnp.float32)
    conv_b = 0.1 * jax.random.normal(k_b, (out_ch,), dtype=jnp.float32)
    bn_gamma = 1.0 + 0.05 * jax.random.normal(k_g, (out_ch,), dtype=jnp.float32)
    bn_beta = 0.05 * jax.random.normal(k_be, (out_ch,), dtype=jnp.float32)

    out = encode_block(x, conv_w, conv_b, bn_gamma, bn_beta,
                       kernel=kernel, pad=pad, stride=stride)
    out = jax.block_until_ready(out)

    ref = _reference(x, conv_w, conv_b, bn_gamma, bn_beta,
                     kernel=kernel, pad=pad, stride=stride)
    assert out.shape == ref.shape
    # Loose tolerance because the MXU operands are cast to bf16 (f32 accumulation);
    # the reference matmul is full f32.
    assert jnp.max(jnp.abs(out - ref)) < 5e-2

    print("KERNEL_OK")
</pallas_src>

<mosaic_0001>
module attributes {stable_mosaic.version = 11 : i64} {
  func.func @_conv_stats_kernel(%arg0: i32, %arg1: memref<128x128xbf16, #tpu.memory_space<vmem>>, %arg2: memref<128x128xbf16, #tpu.memory_space<vmem>>, %arg3: memref<128x128xf32, #tpu.memory_space<vmem>>, %arg4: memref<1x2x128xf32, #tpu.memory_space<vmem>>) attributes {dimension_semantics = [#tpu.dimension_semantics<parallel>], iteration_bounds = array<i64: 1>, scalar_prefetch = 0 : i64, scratch_operands = 0 : i64, tpu.core_type = #tpu.core_type<tc>, window_params = [{transform_indices = @transform_0, window_bounds = array<i64: 128, 128>}, {pipeline_mode = #tpu.pipeline_mode<synchronous>, transform_indices = @transform_1, window_bounds = array<i64: 128, 128>}, {transform_indices = @transform_2, window_bounds = array<i64: 128, 128>}, {transform_indices = @transform_3, window_bounds = array<i64: 1, 2, 128>}]} {
    %c0 = arith.constant 0 : index
    %c0_0 = arith.constant 0 : index
    %0 = vector.load %arg1[%c0, %c0_0] : memref<128x128xbf16, #tpu.memory_space<vmem>>, vector<128x128xbf16>
    %c0_1 = arith.constant 0 : index
    %c0_2 = arith.constant 0 : index
    %1 = vector.load %arg2[%c0_1, %c0_2] : memref<128x128xbf16, #tpu.memory_space<vmem>>, vector<128x128xbf16>
    %cst = arith.constant dense<0.000000e+00> : vector<128x128xf32>
    %2 = tpu.matmul %0, %1, %cst {dimension_numbers = #tpu.dot_dimension_numbers<[1], [0], [0], [1], [0, 0, 1, 1], [], []>} : vector<128x128xbf16>, vector<128x128xbf16>, vector<128x128xf32> -> vector<128x128xf32>
    %c0_3 = arith.constant 0 : index
    %c0_4 = arith.constant 0 : index
    %3 = vector.load %arg3[%c0_3, %c0_4] : memref<128x128xf32, #tpu.memory_space<vmem>>, vector<128x128xf32>
    tpu.vector_store %arg3[%c0_3, %c0_4], %2 {strides = array<i32>} : memref<128x128xf32, #tpu.memory_space<vmem>>, vector<128x128xf32>,
    %cst_5 = arith.constant dense<0.000000e+00> : vector<128xf32>
    %4 = vector.multi_reduction <add>, %2, %cst_5 [0] : vector<128x128xf32> to vector<128xf32>
    %5 = vector.shape_cast %4 : vector<128xf32> to vector<1x128xf32>
    %6 = arith.mulf %2, %2 : vector<128x128xf32>
    %cst_6 = arith.constant dense<0.000000e+00> : vector<128xf32>
    %7 = vector.multi_reduction <add>, %6, %cst_6 [0] : vector<128x128xf32> to vector<128xf32>
    %8 = vector.shape_cast %7 : vector<128xf32> to vector<1x128xf32>
    %9 = tpu.concatenate %5, %8 in 0 : vector<1x128xf32>, vector<1x128xf32> -> vector<2x128xf32>
    %c0_7 = arith.constant 0 : index
    %c0_8 = arith.constant 0 : index
    %c0_9 = arith.constant 0 : index
    %10 = vector.load %arg4[%c0_7, %c0_8, %c0_9] : memref<1x2x128xf32, #tpu.memory_space<vmem>>, vector<1x2x128xf32>
    %11 = vector.shape_cast %10 : vector<1x2x128xf32> to vector<2x128xf32>
    %12 = vector.shape_cast %9 : vector<2x128xf32> to vector<1x2x128xf32>
    tpu.vector_store %arg4[%c0_7, %c0_8, %c0_9], %12 {strides = array<i32>} : memref<1x2x128xf32, #tpu.memory_space<vmem>>, vector<1x2x128xf32>,
    return
  }
  func.func @transform_0(%arg0: i32) -> (i32, i32) {
    %c0_i32 = arith.constant 0 : i32
    %c0_i32_0 = arith.constant 0 : i32
    return %arg0, %c0_i32 : i32, i32
  }
  func.func @transform_1(%arg0: i32) -> (i32, i32) {
    %c0_i32 = arith.constant 0 : i32
    %c0_i32_0 = arith.constant 0 : i32
    %c0_i32_1 = arith.constant 0 : i32
    return %c0_i32, %c0_i32_0 : i32, i32
  }
  func.func @transform_2(%arg0: i32) -> (i32, i32) {
    %c0_i32 = arith.constant 0 : i32
    %c0_i32_0 = arith.constant 0 : i32
    return %arg0, %c0_i32 : i32, i32
  }
  func.func @transform_3(%arg0: i32) -> (i32, i32, i32) {
    %c0_i32 = arith.constant 0 : i32
    %c0_i32_0 = arith.constant 0 : i32
    %c0_i32_1 = arith.constant 0 : i32
    return %arg0, %c0_i32, %c0_i32_0 : i32, i32, i32
  }
}

module attributes {stable_mosaic.version = 11 : i64} {
  func.func @_bn_relu_kernel(%arg0: i32, %arg1: memref<128x128xf32, #tpu.memory_space<vmem>>, %arg2: memref<1x128xf32, #tpu.memory_space<vmem>>, %arg3: memref<1x128xf32, #tpu.memory_space<vmem>>, %arg4: memref<128x128xf32, #tpu.memory_space<vmem>>) attributes {dimension_semantics = [#tpu.dimension_semantics<parallel>], iteration_bounds = array<i64: 1>, scalar_prefetch = 0 : i64, scratch_operands = 0 : i64, tpu.core_type = #tpu.core_type<tc>, window_params = [{transform_indices = @transform_0, window_bounds = array<i64: 128, 128>}, {pipeline_mode = #tpu.pipeline_mode<synchronous>, transform_indices = @transform_1, window_bounds = array<i64: 1, 128>}, {pipeline_mode = #tpu.pipeline_mode<synchronous>, transform_indices = @transform_2, window_bounds = array<i64: 1, 128>}, {transform_indices = @transform_3, window_bounds = array<i64: 128, 128>}]} {
    %c0 = arith.constant 0 : index
    %c0_0 = arith.constant 0 : index
    %0 = vector.load %arg1[%c0, %c0_0] : memref<128x128xf32, #tpu.memory_space<vmem>>, vector<128x128xf32>
    %c0_1 = arith.constant 0 : index
    %c0_2 = arith.constant 0 : index
    %1 = vector.load %arg2[%c0_1, %c0_2] : memref<1x128xf32, #tpu.memory_space<vmem>>, vector<1x128xf32>
    %2 = vector.broadcast %1 : vector<1x128xf32> to vector<128x128xf32>
    %3 = arith.mulf %0, %2 : vector<128x128xf32>
    %c0_3 = arith.constant 0 : index
    %c0_4 = arith.constant 0 : index
    %4 = vector.load %arg3[%c0_3, %c0_4] : memref<1x128xf32, #tpu.memory_space<vmem>>, vector<1x128xf32>
    %5 = vector.broadcast %4 : vector<1x128xf32> to vector<128x128xf32>
    %6 = arith.addf %3, %5 : vector<128x128xf32>
    %cst = arith.constant 0.000000e+00 : f32
    %7 = vector.broadcast %cst : f32 to vector<128x128xf32>
    %8 = arith.maximumf %6, %7 : vector<128x128xf32>
    %c0_5 = arith.constant 0 : index
    %c0_6 = arith.constant 0 : index
    %9 = vector.load %arg4[%c0_5, %c0_6] : memref<128x128xf32, #tpu.memory_space<vmem>>, vector<128x128xf32>
    tpu.vector_store %arg4[%c0_5, %c0_6], %8 {strides = array<i32>} : memref<128x128xf32, #tpu.memory_space<vmem>>, vector<128x128xf32>,
    return
  }
  func.func @transform_0(%arg0: i32) -> (i32, i32) {
    %c0_i32 = arith.constant 0 : i32
    %c0_i32_0 = arith.constant 0 : i32
    return %arg0, %c0_i32 : i32, i32
  }
  func.func @transform_1(%arg0: i32) -> (i32, i32) {
    %c0_i32 = arith.constant 0 : i32
    %c0_i32_0 = arith.constant 0 : i32
    %c0_i32_1 = arith.constant 0 : i32
    return %c0_i32, %c0_i32_0 : i32, i32
  }
  func.func @transform_2(%arg0: i32) -> (i32, i32) {
    %c0_i32 = arith.constant 0 : i32
    %c0_i32_0 = arith.constant 0 : i32
    %c0_i32_1 = arith.constant 0 : i32
    return %c0_i32, %c0_i32_0 : i32, i32
  }
  func.func @transform_3(%arg0: i32) -> (i32, i32) {
    %c0_i32 = arith.constant 0 : i32
    %c0_i32_0 = arith.constant 0 : i32
    return %arg0, %c0_i32 : i32, i32
  }
}

</mosaic_0001>

<llo_original>
// kernel: encode_block.3
$region0: #{encode_block.3}
  #allocation0 [shape = 'u32[]', space=smem, size = 0x4, offset = 0x4, fixed_abs, tag = 'smem constant byte address 0x4 - core index']
  #allocation1 [shape = 'u32[72,128]{1,0:T(1,128)}', space=vmem, size = 0x9000, scoped, tag = 'internal scratch']
  %s0 = inlined_call_operand.vmem [shape: f32[128,128], index: 0, kind: input, shape index: {}]
  %s1 = inlined_call_operand.vmem [shape: f32[1,128], index: 1, kind: input, shape index: {}]
  %s2 = inlined_call_operand.vmem [shape: f32[1,128], index: 2, kind: input, shape index: {}]
  %s3 = inlined_call_operand.vmem [shape: f32[128,128], index: 3, kind: output, shape index: {}]
  %s4 = sld [smem:[#allocation0]]
  $region22: #{encode_block.3} parent=0
    _
  %s6 = ssub.s32 1, %s4
  %s7 = scalar_select 0, %s6, %s4
  // Predicated region
  $region2: #{encode_block.3} parent=0 // pred_check
    _
  $region3: #{encode_block.3} parent=0 // pred_check_branch
    %9 = sbr.rel (0) target = $region5
  $region4: #{encode_block.3} parent=0 // pred_region
    _
  $region5: #{encode_block.3} parent=0 // pred_fallthru
    _
  // Predicated region
  $region6: #{encode_block.3} parent=0 // pred_check
    _
  $region7: #{encode_block.3} parent=0 // pred_check_branch
    %11 = sbr.rel (0) target = $region9
  $region8: #{encode_block.3} parent=0 // pred_region
    _
  $region9: #{encode_block.3} parent=0 // pred_fallthru
    _
  // Predicated region
  $region10: #{encode_block.3} parent=0 // pred_check
    _
  $region11: #{encode_block.3} parent=0 // pred_check_branch
    %13 = sbr.rel (0) target = $region13
  $region12: #{encode_block.3} parent=0 // pred_region
    _
  $region13: #{encode_block.3} parent=0 // pred_fallthru
    _
  %v14 = vld [vmem:[%s0] sm:$0xff]
  %v15 = vld [vmem:[%s0 + $0x8] sm:$0xff]
  %v16 = vld [vmem:[%s0 + $0x10] sm:$0xff]
  %v17 = vld [vmem:[%s0 + $0x18] sm:$0xff]
  %v18 = vld [vmem:[%s0 + $0x20] sm:$0xff]
  %v19 = vld [vmem:[%s0 + $0x28] sm:$0xff]
  %v20 = vld [vmem:[%s0 + $0x30] sm:$0xff]
  %v21 = vld [vmem:[%s0 + $0x38] sm:$0xff]
  %v22 = vld [vmem:[%s0 + $0x40] sm:$0xff]
  %v23 = vld [vmem:[%s0 + $0x48] sm:$0xff]
  %v24 = vld [vmem:[%s0 + $0x50] sm:$0xff]
  %v25 = vld [vmem:[%s0 + $0x58] sm:$0xff]
  %v26 = vld [vmem:[%s0 + $0x60] sm:$0xff]
  %v27 = vld [vmem:[%s0 + $0x68] sm:$0xff]
  %v28 = vld [vmem:[%s0 + $0x70] sm:$0xff]
  %v29 = vld [vmem:[%s0 + $0x78] sm:$0xff]
  %v30 = vld [vmem:[%s1] sm:$0x1]
  %v32 = vperm.slane %v30, 0
  %v34 = vmul.f32 %v14, %v32
  %v35 = vmul.f32 %v15, %v32
  %v36 = vmul.f32 %v16, %v32
  %v37 = vmul.f32 %v17, %v32
  %v38 = vmul.f32 %v18, %v32
  %v39 = vmul.f32 %v19, %v32
  %v40 = vmul.f32 %v20, %v32
  %v41 = vmul.f32 %v21, %v32
  %v42 = vmul.f32 %v22, %v32
  %v43 = vmul.f32 %v23, %v32
  %v44 = vmul.f32 %v24, %v32
  %v45 = vmul.f32 %v25, %v32
  %v46 = vmul.f32 %v26, %v32
  %v47 = vmul.f32 %v27, %v32
  %v48 = vmul.f32 %v28, %v32
  %v49 = vmul.f32 %v29, %v32
  %v50 = vld [vmem:[%s2] sm:$0x1]
  %v52 = vperm.slane %v50, 0
  %v54 = vadd.f32 %v34, %v52
  %v55 = vadd.f32 %v35, %v52
  %v56 = vadd.f32 %v36, %v52
  %v57 = vadd.f32 %v37, %v52
  %v58 = vadd.f32 %v38, %v52
  %v59 = vadd.f32 %v39, %v52
  %v60 = vadd.f32 %v40, %v52
  %v61 = vadd.f32 %v41, %v52
  %v62 = vadd.f32 %v42, %v52
  %v63 = vadd.f32 %v43, %v52
  %v64 = vadd.f32 %v44, %v52
  %v65 = vadd.f32 %v45, %v52
  %v66 = vadd.f32 %v46, %v52
  %v67 = vadd.f32 %v47, %v52
  %v68 = vadd.f32 %v48, %v52
  %v69 = vadd.f32 %v49, %v52
  %v70 = vmax.f32 %v54, 0.0
  %v71 = vmax.f32 %v55, 0.0
  %v72 = vmax.f32 %v56, 0.0
  %v73 = vmax.f32 %v57, 0.0
  %v74 = vmax.f32 %v58, 0.0
  %v75 = vmax.f32 %v59, 0.0
  %v76 = vmax.f32 %v60, 0.0
  %v77 = vmax.f32 %v61, 0.0
  %v78 = vmax.f32 %v62, 0.0
  %v79 = vmax.f32 %v63, 0.0
  %v80 = vmax.f32 %v64, 0.0
  %v81 = vmax.f32 %v65, 0.0
  %v82 = vmax.f32 %v66, 0.0
  %v83 = vmax.f32 %v67, 0.0
  %v84 = vmax.f32 %v68, 0.0
  %v85 = vmax.f32 %v69, 0.0
  %86 = vst [vmem:[%s3] sm:$0xff] %v70
  %87 = vst [vmem:[%s3 + $0x8] sm:$0xff] %v71
  %88 = vst [vmem:[%s3 + $0x10] sm:$0xff] %v72
  %89 = vst [vmem:[%s3 + $0x18] sm:$0xff] %v73
  %90 = vst [vmem:[%s3 + $0x20] sm:$0xff] %v74
  %91 = vst [vmem:[%s3 + $0x28] sm:$0xff] %v75
  %92 = vst [vmem:[%s3 + $0x30] sm:$0xff] %v76
  %93 = vst [vmem:[%s3 + $0x38] sm:$0xff] %v77
  %94 = vst [vmem:[%s3 + $0x40] sm:$0xff] %v78
  %95 = vst [vmem:[%s3 + $0x48] sm:$0xff] %v79
  %96 = vst [vmem:[%s3 + $0x50] sm:$0xff] %v80
  %97 = vst [vmem:[%s3 + $0x58] sm:$0xff] %v81
  %98 = vst [vmem:[%s3 + $0x60] sm:$0xff] %v82
  %99 = vst [vmem:[%s3 + $0x68] sm:$0xff] %v83
  %100 = vst [vmem:[%s3 + $0x70] sm:$0xff] %v84
  %101 = vst [vmem:[%s3 + $0x78] sm:$0xff] %v85
  // Predicated region
  $region14: #{encode_block.3} parent=0 // pred_check
    _
  $region15: #{encode_block.3} parent=0 // pred_check_branch
    %103 = sbr.rel (0) target = $region17
  $region16: #{encode_block.3} parent=0 // pred_region
    _
  $region17: #{encode_block.3} parent=0 // pred_fallthru
    _
  // Predicated region
  $region18: #{encode_block.3} parent=0 // pred_check
    _
  $region19: #{encode_block.3} parent=0 // pred_check_branch
    %105 = sbr.rel (0) target = $region21
  $region20: #{encode_block.3} parent=0 // pred_region
    _
  $region21: #{encode_block.3} parent=0 // pred_fallthru
    _

// kernel: encode_block.2
$region0: #{encode_block.2}
  #allocation0 [shape = 'u32[]', space=smem, size = 0x4, offset = 0x4, fixed_abs, tag = 'smem constant byte address 0x4 - core index']
  #allocation1 [shape = 'u32[72,128]{1,0:T(1,128)}', space=vmem, size = 0x9000, scoped, tag = 'internal scratch']
  %s0 = inlined_call_operand.vmem [shape: bf16[128,128], index: 0, kind: input, shape index: {}]
  %s1 = inlined_call_operand.vmem [shape: bf16[128,128], index: 1, kind: input, shape index: {}]
  %s2 = inlined_call_operand.vmem [shape: f32[128,128], index: 2, kind: output, shape index: {0}]
  %s3 = inlined_call_operand.vmem [shape: f32[1,2,128], index: 3, kind: output, shape index: {1}]
  %4 = xla_tuple %s2, %s3
  %s5 = sld [smem:[#allocation0]]
  $region26: #{encode_block.2} parent=0
    _
  %s7 = ssub.s32 1, %s5
  %s8 = scalar_select 0, %s7, %s5
  // Predicated region
  $region2: #{encode_block.2} parent=0 // pred_check
    _
  $region3: #{encode_block.2} parent=0 // pred_check_branch
    %10 = sbr.rel (0) target = $region5
  $region4: #{encode_block.2} parent=0 // pred_region
    _
  $region5: #{encode_block.2} parent=0 // pred_fallthru
    _
  // Predicated region
  $region6: #{encode_block.2} parent=0 // pred_check
    _
  $region7: #{encode_block.2} parent=0 // pred_check_branch
    %12 = sbr.rel (0) target = $region9
  $region8: #{encode_block.2} parent=0 // pred_region
    _
  $region9: #{encode_block.2} parent=0 // pred_fallthru
    _
  %v13 = vld [vmem:[%s0] sm:$0xf]
  %v14 = vld [vmem:[%s0 + $0x4] sm:$0xf]
  %v15 = vld [vmem:[%s0 + $0x8] sm:$0xf]
  %v16 = vld [vmem:[%s0 + $0xc] sm:$0xf]
  %v17 = vld [vmem:[%s0 + $0x10] sm:$0xf]
  %v18 = vld [vmem:[%s0 + $0x14] sm:$0xf]
  %v19 = vld [vmem:[%s0 + $0x18] sm:$0xf]
  %v20 = vld [vmem:[%s0 + $0x1c] sm:$0xf]
  %v21 = vld [vmem:[%s0 + $0x20] sm:$0xf]
  %v22 = vld [vmem:[%s0 + $0x24] sm:$0xf]
  %v23 = vld [vmem:[%s0 + $0x28] sm:$0xf]
  %v24 = vld [vmem:[%s0 + $0x2c] sm:$0xf]
  %v25 = vld [vmem:[%s0 + $0x30] sm:$0xf]
  %v26 = vld [vmem:[%s0 + $0x34] sm:$0xf]
  %v27 = vld [vmem:[%s0 + $0x38] sm:$0xf]
  %v28 = vld [vmem:[%s0 + $0x3c] sm:$0xf]
  %v29 = vld [vmem:[%s1] sm:$0xf]
  %v30 = vld [vmem:[%s1 + $0x4] sm:$0xf]
  %v31 = vld [vmem:[%s1 + $0x8] sm:$0xf]
  %v32 = vld [vmem:[%s1 + $0xc] sm:$0xf]
  %v33 = vld [vmem:[%s1 + $0x10] sm:$0xf]
  %v34 = vld [vmem:[%s1 + $0x14] sm:$0xf]
  %v35 = vld [vmem:[%s1 + $0x18] sm:$0xf]
  %v36 = vld [vmem:[%s1 + $0x1c] sm:$0xf]
  %v37 = vld [vmem:[%s1 + $0x20] sm:$0xf]
  %v38 = vld [vmem:[%s1 + $0x24] sm:$0xf]
  %v39 = vld [vmem:[%s1 + $0x28] sm:$0xf]
  %v40 = vld [vmem:[%s1 + $0x2c] sm:$0xf]
  %v41 = vld [vmem:[%s1 + $0x30] sm:$0xf]
  %v42 = vld [vmem:[%s1 + $0x34] sm:$0xf]
  %v43 = vld [vmem:[%s1 + $0x38] sm:$0xf]
  %v44 = vld [vmem:[%s1 + $0x3c] sm:$0xf]
  %v61 = vunpack.c.l.b16 %v13
  %v62 = vunpack.c.l.b16 %v14
  %v63 = vunpack.c.l.b16 %v15
  %v64 = vunpack.c.l.b16 %v16
  %v65 = vunpack.c.l.b16 %v17
  %v66 = vunpack.c.l.b16 %v18
  %v67 = vunpack.c.l.b16 %v19
  %v68 = vunpack.c.l.b16 %v20
  %v69 = vunpack.c.l.b16 %v21
  %v70 = vunpack.c.l.b16 %v22
  %v71 = vunpack.c.l.b16 %v23
  %v72 = vunpack.c.l.b16 %v24
  %v73 = vunpack.c.l.b16 %v25
  %v74 = vunpack.c.l.b16 %v26
  %v75 = vunpack.c.l.b16 %v27
  %v76 = vunpack.c.l.b16 %v28
  %v77 = vpack.c.b16 %v62, %v61
  %v78 = vpack.c.b16 %v64, %v63
  %v79 = vpack.c.b16 %v66, %v65
  %v80 = vpack.c.b16 %v68, %v67
  %v81 = vpack.c.b16 %v70, %v69
  %v82 = vpack.c.b16 %v72, %v71
  %v83 = vpack.c.b16 %v74, %v73
  %v84 = vpack.c.b16 %v76, %v75
  %v109 = vunpack.c.l.b16 %v29
  %v110 = vunpack.c.l.b16 %v30
  %v111 = vunpack.c.l.b16 %v31
  %v112 = vunpack.c.l.b16 %v32
  %v113 = vunpack.c.l.b16 %v33
  %v114 = vunpack.c.l.b16 %v34
  %v115 = vunpack.c.l.b16 %v35
  %v116 = vunpack.c.l.b16 %v36
  %v117 = vunpack.c.l.b16 %v37
  %v118 = vunpack.c.l.b16 %v38
  %v119 = vunpack.c.l.b16 %v39
  %v120 = vunpack.c.l.b16 %v40
  %v121 = vunpack.c.l.b16 %v41
  %v122 = vunpack.c.l.b16 %v42
  %v123 = vunpack.c.l.b16 %v43
  %v124 = vunpack.c.l.b16 %v44
  %v125 = vpack.c.b16 %v110, %v109
  %v126 = vpack.c.b16 %v112, %v111
  %v127 = vpack.c.b16 %v114, %v113
  %v128 = vpack.c.b16 %v116, %v115
  %v129 = vpack.c.b16 %v118, %v117
  %v130 = vpack.c.b16 %v120, %v119
  %v131 = vpack.c.b16 %v122, %v121
  %v132 = vpack.c.b16 %v124, %v123
  %141 = vmatpush.bf16.msra.mxu0 %v132
  %142 = vmatpush.bf16.msra.mxu0 %v131
  %143 = vmatpush.bf16.msra.mxu0 %v130
  %144 = vmatpush.bf16.msra.mxu0 %v129
  %145 = vmatpush.bf16.msra.mxu0 %v128
  %146 = vmatpush.bf16.msra.mxu0 %v127
  %147 = vmatpush.bf16.msra.mxu0 %v126
  %148 = vmatpush.bf16.msra.mxu0 %v125
  %149 = vmatmul.bf16.gmra.mxu0 %v77
  %v150 = vpop.f32.mrf.mxu0
  %v151 = vadd.f32 0.0, %v150
  %v152 = vpop.f32.mrf.mxu0
  %v153 = vadd.f32 0.0, %v152
  %154 = vmatmul.bf16.gmra.mxu0 %v78
  %v155 = vpop.f32.mrf.mxu0
  %v156 = vadd.f32 0.0, %v155
  %v157 = vpop.f32.mrf.mxu0
  %v158 = vadd.f32 0.0, %v157
  %159 = vmatmul.bf16.gmra.mxu0 %v79
  %v160 = vpop.f32.mrf.mxu0
  %v161 = vadd.f32 0.0, %v160
  %v162 = vpop.f32.mrf.mxu0
  %v163 = vadd.f32 0.0, %v162
  %164 = vmatmul.bf16.gmra.mxu0 %v80
  %v165 = vpop.f32.mrf.mxu0
  %v166 = vadd.f32 0.0, %v165
  %v167 = vpop.f32.mrf.mxu0
  %v168 = vadd.f32 0.0, %v167
  %169 = vmatmul.bf16.gmra.mxu0 %v81
  %v170 = vpop.f32.mrf.mxu0
  %v171 = vadd.f32 0.0, %v170
  %v172 = vpop.f32.mrf.mxu0
  %v173 = vadd.f32 0.0, %v172
  %174 = vmatmul.bf16.gmra.mxu0 %v82
  %v175 = vpop.f32.mrf.mxu0
  %v176 = vadd.f32 0.0, %v175
  %v177 = vpop.f32.mrf.mxu0
  %v178 = vadd.f32 0.0, %v177
  %179 = vmatmul.bf16.gmra.mxu0 %v83
  %v180 = vpop.f32.mrf.mxu0
  %v181 = vadd.f32 0.0, %v180
  %v182 = vpop.f32.mrf.mxu0
  %v183 = vadd.f32 0.0, %v182
  %184 = vmatmul.bf16.gmra.mxu0 %v84
  %v185 = vpop.f32.mrf.mxu0
  %v186 = vadd.f32 0.0, %v185
  %v187 = vpop.f32.mrf.mxu0
  %v188 = vadd.f32 0.0, %v187
  %189 = vdwg.mxu0
  %190 = vst [vmem:[%s2] sm:$0xff] %v151
  %191 = vst [vmem:[%s2 + $0x8] sm:$0xff] %v153
  %192 = vst [vmem:[%s2 + $0x10] sm:$0xff] %v156
  %193 = vst [vmem:[%s2 + $0x18] sm:$0xff] %v158
  %194 = vst [vmem:[%s2 + $0x20] sm:$0xff] %v161
  %195 = vst [vmem:[%s2 + $0x28] sm:$0xff] %v163
  %196 = vst [vmem:[%s2 + $0x30] sm:$0xff] %v166
  %197 = vst [vmem:[%s2 + $0x38] sm:$0xff] %v168
  %198 = vst [vmem:[%s2 + $0x40] sm:$0xff] %v171
  %199 = vst [vmem:[%s2 + $0x48] sm:$0xff] %v173
  %200 = vst [vmem:[%s2 + $0x50] sm:$0xff] %v176
  %201 = vst [vmem:[%s2 + $0x58] sm:$0xff] %v178
  %202 = vst [vmem:[%s2 + $0x60] sm:$0xff] %v181
  %203 = vst [vmem:[%s2 + $0x68] sm:$0xff] %v183
  %204 = vst [vmem:[%s2 + $0x70] sm:$0xff] %v186
  %205 = vst [vmem:[%s2 + $0x78] sm:$0xff] %v188
  %v206 = vadd.f32 %v151, %v153
  %v207 = vadd.f32 %v206, %v156
  %v208 = vadd.f32 %v207, %v158
  %v209 = vadd.f32 %v208, %v161
  %v210 = vadd.f32 %v209, %v163
  %v211 = vadd.f32 %v210, %v166
  %v212 = vadd.f32 %v211, %v168
  %v213 = vadd.f32 %v212, %v171
  %v214 = vadd.f32 %v213, %v173
  %v215 = vadd.f32 %v214, %v176
  %v216 = vadd.f32 %v215, %v178
  %v217 = vadd.f32 %v216, %v181
  %v218 = vadd.f32 %v217, %v183
  %v219 = vadd.f32 %v218, %v186
  %v220 = vadd.f32 %v219, %v188
  %v221 = vrot.slane %v220, 4
  %v222 = vadd.f32 %v220, %v221
  %v223 = vrot.slane %v222, 2
  %v224 = vadd.f32 %v222, %v223
  %v225 = vrot.slane %v224, 1
  %v226 = vadd.f32 %v224, %v225
  %v227 = vmul.f32 %v151, %v151
  %v228 = vmul.f32 %v153, %v153
  %v229 = vmul.f32 %v156, %v156
  %v230 = vmul.f32 %v158, %v158
  %v231 = vmul.f32 %v161, %v161
  %v232 = vmul.f32 %v163, %v163
  %v233 = vmul.f32 %v166, %v166
  %v234 = vmul.f32 %v168, %v168
  %v235 = vmul.f32 %v171, %v171
  %v236 = vmul.f32 %v173, %v173
  %v237 = vmul.f32 %v176, %v176
  %v238 = vmul.f32 %v178, %v178
  %v239 = vmul.f32 %v181, %v181
  %v240 = vmul.f32 %v183, %v183
  %v241 = vmul.f32 %v186, %v186
  %v242 = vmul.f32 %v188, %v188
  %v243 = vadd.f32 %v227, %v228
  %v244 = vadd.f32 %v243, %v229
  %v245 = vadd.f32 %v244, %v230
  %v246 = vadd.f32 %v245, %v231
  %v247 = vadd.f32 %v246, %v232
  %v248 = vadd.f32 %v247, %v233
  %v249 = vadd.f32 %v248, %v234
  %v250 = vadd.f32 %v249, %v235
  %v251 = vadd.f32 %v250, %v236
  %v252 = vadd.f32 %v251, %v237
  %v253 = vadd.f32 %v252, %v238
  %v254 = vadd.f32 %v253, %v239
  %v255 = vadd.f32 %v254, %v240
  %v256 = vadd.f32 %v255, %v241
  %v257 = vadd.f32 %v256, %v242
  %v258 = vrot.slane %v257, 4
  %v259 = vadd.f32 %v257, %v258
  %v260 = vrot.slane %v259, 2
  %v261 = vadd.f32 %v259, %v260
  %v262 = vrot.slane %v261, 1
  %v263 = vadd.f32 %v261, %v262
  %vm264 = vcmask 1040384
  %v265 = vsel %vm264, %v226, %v263
  %266 = vst [vmem:[%s3] sm:$0x3] %v265
  // Predicated region
  $region10: #{encode_block.2} parent=0 // pred_check
    _
  $region11: #{encode_block.2} parent=0 // pred_check_branch
    %268 = sbr.rel (0) target = $region13
  $region12: #{encode_block.2} parent=0 // pred_region
    _
  $region13: #{encode_block.2} parent=0 // pred_fallthru
    _
  // Predicated region
  $region14: #{encode_block.2} parent=0 // pred_check
    _
  $region15: #{encode_block.2} parent=0 // pred_check_branch
    %270 = sbr.rel (0) target = $region17
  $region16: #{encode_block.2} parent=0 // pred_region
    _
  $region17: #{encode_block.2} parent=0 // pred_fallthru
    _
  // Predicated region
  $region18: #{encode_block.2} parent=0 // pred_check
    _
  $region19: #{encode_block.2} parent=0 // pred_check_branch
    %272 = sbr.rel (0) target = $region21
  $region20: #{encode_block.2} parent=0 // pred_region
    _
  $region21: #{encode_block.2} parent=0 // pred_fallthru
    _
  // Predicated region
  $region22: #{encode_block.2} parent=0 // pred_check
    _
  $region23: #{encode_block.2} parent=0 // pred_check_branch
    %274 = sbr.rel (0) target = $region25
  $region24: #{encode_block.2} parent=0 // pred_region
    _
  $region25: #{encode_block.2} parent=0 // pred_fallthru
    _

</llo_original>
